<compile_context>
chip_gen: v5e
topology: v5e:2x2
jax: 0.10.0
libtpu: 0.0.40
codegen_flags: <defaults>
</compile_context>

<pallas_src>
import functools

import jax
import jax.numpy as jnp
from jax.experimental import pallas as pl
from jax.experimental.pallas import tpu as pltpu

# ---- module hyper-params (ClsHead(input_dim=256, num_classes=2)) ----
INPUT_DIM   = 256
NUM_CLASSES = 2
LANE        = 128
SUBLANE     = 8
NC_PAD      = ((NUM_CLASSES + LANE - 1) // LANE) * LANE   # 128: lane-dense output width

# Tile caps: full-size x tile = 128*32*256*4 B = 4 MiB f32 (double-buffered: 8 MiB),
# comfortably under the scoped-VMEM default on all of v5e / v6e / v7x.
MAX_TB = 128
MAX_TL = 32


def _round_up(n, m):
    return ((n + m - 1) // m) * m


# ----------------------------- fused ClsHead kernel -----------------------------
def _cls_head_kernel(x_ref, w_ref, b_ref, o_ref, acc_ref):
    # x_ref: (TB, TL, C)   w_ref: (C, NC_PAD)  (pre-scaled by 1/L)
    # b_ref: (1, NC_PAD)   o_ref: (TB, NC_PAD)   acc_ref: (TB, C) f32 scratch
    l = pl.program_id(1)

    @pl.when(l == 0)
    def _():
        acc_ref[...] = jnp.zeros_like(acc_ref)

    # Partial sequence-sum for this L tile (1/L is folded into w_ref, so raw
    # sums accumulate correctly across L tiles; zero-padded rows add nothing).
    acc_ref[...] += jnp.sum(x_ref[...].astype(jnp.float32), axis=1)

    @pl.when(l == pl.num_programs(1) - 1)
    def _():
        # Dropout(p=0) is the identity; single MXU matmul per output tile.
        o_ref[...] = (
            jnp.dot(acc_ref[...], w_ref[...], preferred_element_type=jnp.float32)
            + b_ref[...]
        )


# ----------------------------- parameter prep (once per model) -----------------------------
def prepare_params(fc_weight, fc_bias, seq_len):
    """Pad nn.Linear params to a lane-dense (C, 128) slab, folding 1/seq_len into the weight.

    fc_weight: (num_classes, C) as stored by torch nn.Linear; fc_bias: (num_classes,).
    """
    nc, c = fc_weight.shape
    w_pad = jnp.zeros((c, NC_PAD), jnp.float32)
    w_pad = w_pad.at[:, :nc].set(fc_weight.T.astype(jnp.float32) / float(seq_len))
    b_pad = jnp.zeros((1, NC_PAD), jnp.float32).at[0, :nc].set(fc_bias.astype(jnp.float32))
    return w_pad, b_pad


# ----------------------------- wrapper -----------------------------
@functools.partial(jax.jit, static_argnames=("num_classes",))
def cls_head(x, w_pad, b_pad, num_classes=NUM_CLASSES):
    """x: (B, L, C) f32/bf16;  w_pad: (C, 128) f32 (pre-scaled by 1/L);  b_pad: (1, 128) f32."""
    B, L, C = x.shape

    # Tile sizes: multiples of the sublane (8); capped so one x tile is ~4 MiB f32.
    TB = min(MAX_TB, _round_up(B, SUBLANE))
    TL = min(MAX_TL, _round_up(L, SUBLANE))
    B_pad = _round_up(B, TB)
    L_pad = _round_up(L, TL)
    if (B_pad, L_pad) != (B, L):
        # Zero padding: padded L rows contribute 0 to the sum; padded B rows are sliced off.
        x = jnp.pad(x, ((0, B_pad - B), (0, L_pad - L), (0, 0)))

    out_pad = pl.pallas_call(
        _cls_head_kernel,
        out_shape=jax.ShapeDtypeStruct((B_pad, NC_PAD), jnp.float32),
        grid_spec=pltpu.PrefetchScalarGridSpec(
            num_scalar_prefetch=0,
            # Batch tiles (parallel, split across v7x's two TensorCores),
            # sequence/reduction tiles last (arbitrary, accumulated in scratch).
            grid=(B_pad // TB, L_pad // TL),
            in_specs=[
                pl.BlockSpec((TB, TL, C), lambda i, l: (i, l, 0)),
                pl.BlockSpec((C, NC_PAD), lambda i, l: (0, 0)),
                pl.BlockSpec((1, NC_PAD), lambda i, l: (0, 0)),
            ],
            out_specs=pl.BlockSpec((TB, NC_PAD), lambda i, l: (i, 0)),
            scratch_shapes=[pltpu.VMEM((TB, C), jnp.float32)],
        ),
        compiler_params=pltpu.CompilerParams(
            dimension_semantics=("parallel", "arbitrary"),
            vmem_limit_bytes=32 * 1024 * 1024,  # ~8.5 MiB worst-case use; safe on v5e/v6e/v7x
        ),
    )(x, w_pad, b_pad)

    return out_pad[:B, :num_classes]


# ----------------------------- pure-JAX reference (same math) -----------------------------
def reference(x, fc_weight, fc_bias):
    pooled = jnp.mean(x, axis=1)              # AdaptiveAvgPool1d(1) after permute
    return pooled @ fc_weight.T + fc_bias     # Dropout(p=0) is identity


if __name__ == "__main__":
    key = jax.random.PRNGKey(0)
    kx, kw, kb = jax.random.split(key, 3)

    B, L, C = 2, 8, INPUT_DIM                 # (batch, seq, input_dim)
    x = jax.random.normal(kx, (B, L, C), jnp.float32)

    # nn.Linear(input_dim, num_classes): weight (num_classes, input_dim), bias (num_classes,)
    fc_weight = jax.random.normal(kw, (NUM_CLASSES, C), jnp.float32) * (1.0 / jnp.sqrt(C))
    fc_bias   = jax.random.normal(kb, (NUM_CLASSES,), jnp.float32) * 0.05

    # Hoisted out of the per-call path: pad params once, fold 1/L into the weight.
    w_pad, b_pad = prepare_params(fc_weight, fc_bias, seq_len=L)

    out = cls_head(x, w_pad, b_pad, num_classes=NUM_CLASSES)
    out = jax.block_until_ready(out)

    ref = reference(x, fc_weight, fc_bias)
    assert out.shape == (B, NUM_CLASSES)
    assert bool(jnp.all(jnp.isfinite(out)))
    max_err = float(jnp.max(jnp.abs(out - ref)))
    assert bool(jnp.allclose(out, ref, rtol=1e-4, atol=1e-4)), max_err
    print("KERNEL_OK")
</pallas_src>

<mosaic_0001>
module attributes {stable_mosaic.version = 11 : i64} {
  func.func @_cls_head_kernel(%arg0: i32, %arg1: i32, %arg2: memref<8x8x256xf32, #tpu.memory_space<vmem>>, %arg3: memref<256x128xf32, #tpu.memory_space<vmem>>, %arg4: memref<1x128xf32, #tpu.memory_space<vmem>>, %arg5: memref<8x128xf32, #tpu.memory_space<vmem>>, %arg6: memref<8x256xf32, #tpu.memory_space<vmem>>) attributes {dimension_semantics = [#tpu.dimension_semantics<parallel>, #tpu.dimension_semantics<arbitrary>], iteration_bounds = array<i64: 1, 1>, scalar_prefetch = 0 : i64, scratch_operands = 1 : i64, tpu.core_type = #tpu.core_type<tc>, window_params = [{transform_indices = @transform_0, window_bounds = array<i64: 8, 8, 256>}, {pipeline_mode = #tpu.pipeline_mode<synchronous>, transform_indices = @transform_1, window_bounds = array<i64: 256, 128>}, {pipeline_mode = #tpu.pipeline_mode<synchronous>, transform_indices = @transform_2, window_bounds = array<i64: 1, 128>}, {transform_indices = @transform_3, window_bounds = array<i64: 8, 128>}]} {
    %c0_i32 = arith.constant 0 : i32
    %0 = arith.cmpi eq, %arg1, %c0_i32 : i32
    %1 = arith.extui %0 : i1 to i32
    %c0_i32_0 = arith.constant 0 : i32
    %2 = arith.cmpi ne, %1, %c0_i32_0 : i32
    scf.if %2 {
      %cst_9 = arith.constant 0.000000e+00 : f32
      %11 = vector.broadcast %cst_9 : f32 to vector<8x256xf32>
      %c0_10 = arith.constant 0 : index
      %c0_11 = arith.constant 0 : index
      %12 = vector.load %arg6[%c0_10, %c0_11] : memref<8x256xf32, #tpu.memory_space<vmem>>, vector<8x256xf32>
      tpu.vector_store %arg6[%c0_10, %c0_11], %11 {strides = array<i32>} : memref<8x256xf32, #tpu.memory_space<vmem>>, vector<8x256xf32>,
    } else {
    }
    %c0 = arith.constant 0 : index
    %c0_1 = arith.constant 0 : index
    %3 = vector.load %arg6[%c0, %c0_1] : memref<8x256xf32, #tpu.memory_space<vmem>>, vector<8x256xf32>
    %c0_2 = arith.constant 0 : index
    %c0_3 = arith.constant 0 : index
    %c0_4 = arith.constant 0 : index
    %4 = vector.load %arg2[%c0_2, %c0_3, %c0_4] : memref<8x8x256xf32, #tpu.memory_space<vmem>>, vector<8x8x256xf32>
    %cst = arith.constant dense<0.000000e+00> : vector<8x256xf32>
    %5 = vector.multi_reduction <add>, %4, %cst [1] : vector<8x8x256xf32> to vector<8x256xf32>
    %6 = arith.addf %3, %5 : vector<8x256xf32>
    %c0_5 = arith.constant 0 : index
    %c0_6 = arith.constant 0 : index
    %7 = vector.load %arg6[%c0_5, %c0_6] : memref<8x256xf32, #tpu.memory_space<vmem>>, vector<8x256xf32>
    tpu.vector_store %arg6[%c0_5, %c0_6], %6 {strides = array<i32>} : memref<8x256xf32, #tpu.memory_space<vmem>>, vector<8x256xf32>,
    %c0_i32_7 = arith.constant 0 : i32
    %8 = arith.cmpi eq, %arg1, %c0_i32_7 : i32
    %9 = arith.extui %8 : i1 to i32
    %c0_i32_8 = arith.constant 0 : i32
    %10 = arith.cmpi ne, %9, %c0_i32_8 : i32
    scf.if %10 {
      %c0_9 = arith.constant 0 : index
      %c0_10 = arith.constant 0 : index
      %11 = vector.load %arg6[%c0_9, %c0_10] : memref<8x256xf32, #tpu.memory_space<vmem>>, vector<8x256xf32>
      %c0_11 = arith.constant 0 : index
      %c0_12 = arith.constant 0 : index
      %12 = vector.load %arg3[%c0_11, %c0_12] : memref<256x128xf32, #tpu.memory_space<vmem>>, vector<256x128xf32>
      %cst_13 = arith.constant dense<0.000000e+00> : vector<8x128xf32>
      %13 = tpu.matmul %11, %12, %cst_13 {dimension_numbers = #tpu.dot_dimension_numbers<[1], [0], [0], [1], [0, 0, 1, 1], [], []>} : vector<8x256xf32>, vector<256x128xf32>, vector<8x128xf32> -> vector<8x128xf32>
      %c0_14 = arith.constant 0 : index
      %c0_15 = arith.constant 0 : index
      %14 = vector.load %arg4[%c0_14, %c0_15] : memref<1x128xf32, #tpu.memory_space<vmem>>, vector<1x128xf32>
      %15 = vector.broadcast %14 : vector<1x128xf32> to vector<8x128xf32>
      %16 = arith.addf %13, %15 : vector<8x128xf32>
      %c0_16 = arith.constant 0 : index
      %c0_17 = arith.constant 0 : index
      %17 = vector.load %arg5[%c0_16, %c0_17] : memref<8x128xf32, #tpu.memory_space<vmem>>, vector<8x128xf32>
      tpu.vector_store %arg5[%c0_16, %c0_17], %16 {strides = array<i32>} : memref<8x128xf32, #tpu.memory_space<vmem>>, vector<8x128xf32>,
    } else {
    }
    return
  }
  func.func @transform_0(%arg0: i32, %arg1: i32) -> (i32, i32, i32) {
    %c0_i32 = arith.constant 0 : i32
    %c0_i32_0 = arith.constant 0 : i32
    return %arg0, %arg1, %c0_i32 : i32, i32, i32
  }
  func.func @transform_1(%arg0: i32, %arg1: i32) -> (i32, i32) {
    %c0_i32 = arith.constant 0 : i32
    %c0_i32_0 = arith.constant 0 : i32
    %c0_i32_1 = arith.constant 0 : i32
    return %c0_i32, %c0_i32_0 : i32, i32
  }
  func.func @transform_2(%arg0: i32, %arg1: i32) -> (i32, i32) {
    %c0_i32 = arith.constant 0 : i32
    %c0_i32_0 = arith.constant 0 : i32
    %c0_i32_1 = arith.constant 0 : i32
    return %c0_i32, %c0_i32_0 : i32, i32
  }
  func.func @transform_3(%arg0: i32, %arg1: i32) -> (i32, i32) {
    %c0_i32 = arith.constant 0 : i32
    %c0_i32_0 = arith.constant 0 : i32
    return %arg0, %c0_i32 : i32, i32
  }
}

</mosaic_0001>

<llo_original>
// kernel: cls_head.1
$region0: #{cls_head.1}
  #allocation0 [shape = 'u32[]', space=smem, size = 0x4, offset = 0x4, fixed_abs, tag = 'smem constant byte address 0x4 - core index']
  #allocation1 [shape = 'u32[72,128]{1,0:T(1,128)}', space=vmem, size = 0x9000, scoped, tag = 'internal scratch']
  #allocation2 [shape = 'f32[8,256]{1,0:T(8,128)}', space=vmem, size = 0x2000, scoped, tag = 'scratch operand']
  %s0 = inlined_call_operand.vmem [shape: f32[8,8,256], index: 0, kind: input, shape index: {}]
  %s1 = inlined_call_operand.hbm [shape: f32[256,128], index: 1, kind: input, shape index: {}]
  %s2 = inlined_call_operand.vmem [shape: f32[1,128], index: 2, kind: input, shape index: {}]
  %s3 = inlined_call_operand.vmem [shape: f32[8,128], index: 3, kind: output, shape index: {}]
  %s4 = sld [smem:[#allocation0]]
  $region34: #{cls_head.1} parent=0
    _
  %s6 = ssub.s32 1, %s4
  %s7 = scalar_select 0, %s6, %s4
  $region1: #{cls_head.1} parent=0
    #allocation3 [shape = 'u8[131072]{0}', space=vmem, size = 0x20000, scoped, tag = 'input window, operand 1, single buffered']
    #allocation4 [shape = 's32[1]{0}', space=sflag, size = 0x4, scoped, tag = 'scoped memory for cls_head.1']
    %8 = vsyncpa [#allocation4], 0
    // Predicated region
    $region2: #{cls_head.1} parent=1 // pred_check
      _
    $region3: #{cls_head.1} parent=1 // pred_check_branch
      %10 = sbr.rel (0) target = $region5
    $region4: #{cls_head.1} parent=1 // pred_region
      _
    $region5: #{cls_head.1} parent=1 // pred_fallthru
      _
    // Predicated region
    $region6: #{cls_head.1} parent=1 // pred_check
      _
    $region7: #{cls_head.1} parent=1 // pred_check_branch
      %12 = sbr.rel (0) target = $region9
    $region8: #{cls_head.1} parent=1 // pred_region
      %14 = vsyncadd [#allocation4], 0
      %s15 = sshll.u32 %s1, 4
      %s16 = int_to_ptr.hbm [resolvable:$true] %s15
      %s17 = sshll.u32 [#allocation3], 4
      %s18 = int_to_ptr.vmem [resolvable:$true] %s17
      %23 = dma.hbm_to_vmem [thread:$0]  %s16, 4096, %s18, [#allocation4], 128, 128, 8
    $region9: #{cls_head.1} parent=1 // pred_fallthru
      _
    // Predicated region
    $region10: #{cls_head.1} parent=1 // pred_check
      _
    $region11: #{cls_head.1} parent=1 // pred_check_branch
      %25 = sbr.rel (0) target = $region13
    $region12: #{cls_head.1} parent=1 // pred_region
      _
    $region13: #{cls_head.1} parent=1 // pred_fallthru
      _
    // Predicated region
    $region14: #{cls_head.1} parent=1 // pred_check
      _
    $region15: #{cls_head.1} parent=1 // pred_check_branch
      %27 = sbr.rel (0) target = $region17
    $region16: #{cls_head.1} parent=1 // pred_region
      %29 = dma.done [#allocation4], 4096
    $region17: #{cls_head.1} parent=1 // pred_fallthru
      _
    %p30 = scmp.eq.s32.totalorder 0, 0
    // Predicated region
    $region18: #{cls_head.1} parent=1 // pred_check
      %p31 = pneg %p30
    $region19: #{cls_head.1} parent=1 // pred_check_branch
      %33 = sbr.rel (%p31) target = $region21
    $region20: #{cls_head.1} parent=1 // pred_region
      %34 = vst [vmem:[#allocation2] sm:$0xff] 0.0
      %35 = vst [vmem:[#allocation2 + $0x8] sm:$0xff] 0.0
    $region21: #{cls_head.1} parent=1 // pred_fallthru
      _
    %v36 = vld [vmem:[#allocation2] sm:$0xff]
    %v37 = vld [vmem:[#allocation2 + $0x8] sm:$0xff]
    %v38 = vld [vmem:[%s0] sm:$0xff]
    %v39 = vld [vmem:[%s0 + $0x8] sm:$0xff]
    %v40 = vld [vmem:[%s0 + $0x10] sm:$0xff]
    %v41 = vld [vmem:[%s0 + $0x18] sm:$0xff]
    %v42 = vld [vmem:[%s0 + $0x20] sm:$0xff]
    %v43 = vld [vmem:[%s0 + $0x28] sm:$0xff]
    %v44 = vld [vmem:[%s0 + $0x30] sm:$0xff]
    %v45 = vld [vmem:[%s0 + $0x38] sm:$0xff]
    %v46 = vld [vmem:[%s0 + $0x40] sm:$0xff]
    %v47 = vld [vmem:[%s0 + $0x48] sm:$0xff]
    %v48 = vld [vmem:[%s0 + $0x50] sm:$0xff]
    %v49 = vld [vmem:[%s0 + $0x58] sm:$0xff]
    %v50 = vld [vmem:[%s0 + $0x60] sm:$0xff]
    %v51 = vld [vmem:[%s0 + $0x68] sm:$0xff]
    %v52 = vld [vmem:[%s0 + $0x70] sm:$0xff]
    %v53 = vld [vmem:[%s0 + $0x78] sm:$0xff]
    %v54 = vrot.slane %v38, 4
    %v55 = vadd.f32 %v38, %v54
    %v56 = vrot.slane %v55, 2
    %v57 = vadd.f32 %v55, %v56
    %v58 = vrot.slane %v57, 1
    %v59 = vadd.f32 %v57, %v58
    %v60 = vrot.slane %v39, 4
    %v61 = vadd.f32 %v39, %v60
    %v62 = vrot.slane %v61, 2
    %v63 = vadd.f32 %v61, %v62
    %v64 = vrot.slane %v63, 1
    %v65 = vadd.f32 %v63, %v64
    %v66 = vrot.slane %v40, 4
    %v67 = vadd.f32 %v40, %v66
    %v68 = vrot.slane %v67, 2
    %v69 = vadd.f32 %v67, %v68
    %v70 = vrot.slane %v69, 1
    %v71 = vadd.f32 %v69, %v70
    %v72 = vrot.slane %v41, 4
    %v73 = vadd.f32 %v41, %v72
    %v74 = vrot.slane %v73, 2
    %v75 = vadd.f32 %v73, %v74
    %v76 = vrot.slane %v75, 1
    %v77 = vadd.f32 %v75, %v76
    %v78 = vrot.slane %v42, 4
    %v79 = vadd.f32 %v42, %v78
    %v80 = vrot.slane %v79, 2
    %v81 = vadd.f32 %v79, %v80
    %v82 = vrot.slane %v81, 1
    %v83 = vadd.f32 %v81, %v82
    %v84 = vrot.slane %v43, 4
    %v85 = vadd.f32 %v43, %v84
    %v86 = vrot.slane %v85, 2
    %v87 = vadd.f32 %v85, %v86
    %v88 = vrot.slane %v87, 1
    %v89 = vadd.f32 %v87, %v88
    %v90 = vrot.slane %v44, 4
    %v91 = vadd.f32 %v44, %v90
    %v92 = vrot.slane %v91, 2
    %v93 = vadd.f32 %v91, %v92
    %v94 = vrot.slane %v93, 1
    %v95 = vadd.f32 %v93, %v94
    %v96 = vrot.slane %v45, 4
    %v97 = vadd.f32 %v45, %v96
    %v98 = vrot.slane %v97, 2
    %v99 = vadd.f32 %v97, %v98
    %v100 = vrot.slane %v99, 1
    %v101 = vadd.f32 %v99, %v100
    %v102 = vrot.slane %v46, 4
    %v103 = vadd.f32 %v46, %v102
    %v104 = vrot.slane %v103, 2
    %v105 = vadd.f32 %v103, %v104
    %v106 = vrot.slane %v105, 1
    %v107 = vadd.f32 %v105, %v106
    %v108 = vrot.slane %v47, 4
    %v109 = vadd.f32 %v47, %v108
    %v110 = vrot.slane %v109, 2
    %v111 = vadd.f32 %v109, %v110
    %v112 = vrot.slane %v111, 1
    %v113 = vadd.f32 %v111, %v112
    %v114 = vrot.slane %v48, 4
    %v115 = vadd.f32 %v48, %v114
    %v116 = vrot.slane %v115, 2
    %v117 = vadd.f32 %v115, %v116
    %v118 = vrot.slane %v117, 1
    %v119 = vadd.f32 %v117, %v118
    %v120 = vrot.slane %v49, 4
    %v121 = vadd.f32 %v49, %v120
    %v122 = vrot.slane %v121, 2
    %v123 = vadd.f32 %v121, %v122
    %v124 = vrot.slane %v123, 1
    %v125 = vadd.f32 %v123, %v124
    %v126 = vrot.slane %v50, 4
    %v127 = vadd.f32 %v50, %v126
    %v128 = vrot.slane %v127, 2
    %v129 = vadd.f32 %v127, %v128
    %v130 = vrot.slane %v129, 1
    %v131 = vadd.f32 %v129, %v130
    %v132 = vrot.slane %v51, 4
    %v133 = vadd.f32 %v51, %v132
    %v134 = vrot.slane %v133, 2
    %v135 = vadd.f32 %v133, %v134
    %v136 = vrot.slane %v135, 1
    %v137 = vadd.f32 %v135, %v136
    %v138 = vrot.slane %v52, 4
    %v139 = vadd.f32 %v52, %v138
    %v140 = vrot.slane %v139, 2
    %v141 = vadd.f32 %v139, %v140
    %v142 = vrot.slane %v141, 1
    %v143 = vadd.f32 %v141, %v142
    %v144 = vrot.slane %v53, 4
    %v145 = vadd.f32 %v53, %v144
    %v146 = vrot.slane %v145, 2
    %v147 = vadd.f32 %v145, %v146
    %v148 = vrot.slane %v147, 1
    %v149 = vadd.f32 %v147, %v148
    %vm166 = vcmask 1041409
    %v167 = vsel %vm166, %v71, %v59
    %vm168 = vcmask 1042434
    %v169 = vsel %vm168, %v83, %v167
    %vm170 = vcmask 1043459
    %v171 = vsel %vm170, %v95, %v169
    %vm172 = vcmask 1044484
    %v173 = vsel %vm172, %v107, %v171
    %vm174 = vcmask 1045509
    %v175 = vsel %vm174, %v119, %v173
    %vm176 = vcmask 1046534
    %v177 = vsel %vm176, %v131, %v175
    %vm178 = vcmask 1047559
    %v179 = vsel %vm178, %v143, %v177
    %v180 = vsel %vm166, %v77, %v65
    %v181 = vsel %vm168, %v89, %v180
    %v182 = vsel %vm170, %v101, %v181
    %v183 = vsel %vm172, %v113, %v182
    %v184 = vsel %vm174, %v125, %v183
    %v185 = vsel %vm176, %v137, %v184
    %v186 = vsel %vm178, %v149, %v185
    %v189 = vadd.f32 %v36, %v179
    %v190 = vadd.f32 %v37, %v186
    %191 = vst [vmem:[#allocation2] sm:$0xff] %v189
    %192 = vst [vmem:[#allocation2 + $0x8] sm:$0xff] %v190
    // Predicated region
    $region22: #{cls_head.1} parent=1 // pred_check
      %p193 = pneg %p30
    $region23: #{cls_head.1} parent=1 // pred_check_branch
      %195 = sbr.rel (%p193) target = $region25
    $region24: #{cls_head.1} parent=1 // pred_region
      %v196 = vld [vmem:[#allocation2] sm:$0xff]
      %v197 = vld [vmem:[#allocation2 + $0x8] sm:$0xff]
      %v198 = vld [vmem:[#allocation3] sm:$0xff]
      %v199 = vld [vmem:[#allocation3 + $0x8] sm:$0xff]
      %v200 = vld [vmem:[#allocation3 + $0x10] sm:$0xff]
      %v201 = vld [vmem:[#allocation3 + $0x18] sm:$0xff]
      %v202 = vld [vmem:[#allocation3 + $0x20] sm:$0xff]
      %v203 = vld [vmem:[#allocation3 + $0x28] sm:$0xff]
      %v204 = vld [vmem:[#allocation3 + $0x30] sm:$0xff]
      %v205 = vld [vmem:[#allocation3 + $0x38] sm:$0xff]
      %v206 = vld [vmem:[#allocation3 + $0x40] sm:$0xff]
      %v207 = vld [vmem:[#allocation3 + $0x48] sm:$0xff]
      %v208 = vld [vmem:[#allocation3 + $0x50] sm:$0xff]
      %v209 = vld [vmem:[#allocation3 + $0x58] sm:$0xff]
      %v210 = vld [vmem:[#allocation3 + $0x60] sm:$0xff]
      %v211 = vld [vmem:[#allocation3 + $0x68] sm:$0xff]
      %v212 = vld [vmem:[#allocation3 + $0x70] sm:$0xff]
      %v213 = vld [vmem:[#allocation3 + $0x78] sm:$0xff]
      %v214 = vld [vmem:[#allocation3 + $0x80] sm:$0xff]
      %v215 = vld [vmem:[#allocation3 + $0x88] sm:$0xff]
      %v216 = vld [vmem:[#allocation3 + $0x90] sm:$0xff]
      %v217 = vld [vmem:[#allocation3 + $0x98] sm:$0xff]
      %v218 = vld [vmem:[#allocation3 + $0xa0] sm:$0xff]
      %v219 = vld [vmem:[#allocation3 + $0xa8] sm:$0xff]
      %v220 = vld [vmem:[#allocation3 + $0xb0] sm:$0xff]
      %v221 = vld [vmem:[#allocation3 + $0xb8] sm:$0xff]
      %v222 = vld [vmem:[#allocation3 + $0xc0] sm:$0xff]
      %v223 = vld [vmem:[#allocation3 + $0xc8] sm:$0xff]
      %v224 = vld [vmem:[#allocation3 + $0xd0] sm:$0xff]
      %v225 = vld [vmem:[#allocation3 + $0xd8] sm:$0xff]
      %v226 = vld [vmem:[#allocation3 + $0xe0] sm:$0xff]
      %v227 = vld [vmem:[#allocation3 + $0xe8] sm:$0xff]
      %v228 = vld [vmem:[#allocation3 + $0xf0] sm:$0xff]
      %v229 = vld [vmem:[#allocation3 + $0xf8] sm:$0xff]
      %v230 = vld [vmem:[%s2] sm:$0x1]
      %v232 = vperm.slane %v230, 0
      %234 = vmatpush.msra.mxu0 %v213
      %235 = vmatpush.msra.mxu0 %v212
      %236 = vmatpush.msra.mxu0 %v211
      %237 = vmatpush.msra.mxu0 %v210
      %238 = vmatpush.msra.mxu0 %v209
      %239 = vmatpush.msra.mxu0 %v208
      %240 = vmatpush.msra.mxu0 %v207
      %241 = vmatpush.msra.mxu0 %v206
      %242 = vmatpush.msra.mxu0 %v205
      %243 = vmatpush.msra.mxu0 %v204
      %244 = vmatpush.msra.mxu0 %v203
      %245 = vmatpush.msra.mxu0 %v202
      %246 = vmatpush.msra.mxu0 %v201
      %247 = vmatpush.msra.mxu0 %v200
      %248 = vmatpush.msra.mxu0 %v199
      %249 = vmatpush.msra.mxu0 %v198
      %250 = vmatmul.f32.gmra.mxu0 %v196
      %v251 = vpop.f32.mrf.mxu0
      %v252 = vadd.f32 %v232, %v251
      %253 = vdwg.mxu0
      %254 = vmatpush.msra.mxu0 %v229
      %255 = vmatpush.msra.mxu0 %v228
      %256 = vmatpush.msra.mxu0 %v227
      %257 = vmatpush.msra.mxu0 %v226
      %258 = vmatpush.msra.mxu0 %v225
      %259 = vmatpush.msra.mxu0 %v224
      %260 = vmatpush.msra.mxu0 %v223
      %261 = vmatpush.msra.mxu0 %v222
      %262 = vmatpush.msra.mxu0 %v221
      %263 = vmatpush.msra.mxu0 %v220
      %264 = vmatpush.msra.mxu0 %v219
      %265 = vmatpush.msra.mxu0 %v218
      %266 = vmatpush.msra.mxu0 %v217
      %267 = vmatpush.msra.mxu0 %v216
      %268 = vmatpush.msra.mxu0 %v215
      %269 = vmatpush.msra.mxu0 %v214
      %270 = vmatmul.f32.gmra.mxu0 %v197
      %v271 = vpop.f32.mrf.mxu0
      %v272 = vadd.f32 %v252, %v271
      %273 = vdwg.mxu0
      %274 = vst [vmem:[%s3] sm:$0xff] %v272
    $region25: #{cls_head.1} parent=1 // pred_fallthru
      _
    // Predicated region
    $region26: #{cls_head.1} parent=1 // pred_check
      _
    $region27: #{cls_head.1} parent=1 // pred_check_branch
      %276 = sbr.rel (0) target = $region29
    $region28: #{cls_head.1} parent=1 // pred_region
      _
    $region29: #{cls_head.1} parent=1 // pred_fallthru
      _
    // Predicated region
    $region30: #{cls_head.1} parent=1 // pred_check
      _
    $region31: #{cls_head.1} parent=1 // pred_check_branch
      %278 = sbr.rel (0) target = $region33
    $region32: #{cls_head.1} parent=1 // pred_region
      _
    $region33: #{cls_head.1} parent=1 // pred_fallthru
      _
    %279 = vsyncpa [#allocation4], 1

</llo_original>
